<compile_context>
chip_gen: v6e
topology: v6e:2x2x1
jax: 0.10.0
libtpu: 0.0.40
codegen_flags: <defaults>
</compile_context>

<pallas_src>
import jax
import jax.numpy as jnp
from jax import lax
from jax.experimental import pallas as pl
from jax.experimental.pallas import tpu as pltpu

LOG_SIG_MAX = 2.0
LOG_SIG_MIN = -20.0


def _round_up(x, m):
    return ((x + m - 1) // m) * m


# -----------------------------------------------------------------------------
# Kernel
# -----------------------------------------------------------------------------
def actor_forward_kernel(s_ref, hprev_ref,
                         w1_ref, b1_ref,
                         wih_ref, whh_ref, brnn_ref,
                         whead_ref, bhead_ref,
                         h_ref, rnnin_ref, head_ref):
    s = s_ref[...]            # (TM, Din_p) bf16
    h_prev = hprev_ref[...]   # (TM, H_p)   bf16

    # linear1 + tanh (this is also `rnn_in` returned by the module)
    rnn_in = jnp.tanh(
        jnp.dot(s, w1_ref[...], preferred_element_type=jnp.float32) + b1_ref[...]
    )                         # (TM, H_p) f32

    # Single-step vanilla RNN cell: two accumulating dots, f32 accumulate,
    # bias pre-summed (b_ih + b_hh). No concat / no extra VMEM copy.
    h = jnp.tanh(
        jnp.dot(rnn_in.astype(jnp.bfloat16), wih_ref[...],
                preferred_element_type=jnp.float32)
        + jnp.dot(h_prev, whh_ref[...], preferred_element_type=jnp.float32)
        + brnn_ref[...]
    )                         # (TM, H_p) f32

    # Fused output heads: one matmul producing [mean | log_std] lanes,
    # then a single full-width select that clips only the log_std half.
    head = (jnp.dot(h.astype(jnp.bfloat16), whead_ref[...],
                    preferred_element_type=jnp.float32) + bhead_ref[...])
    a_p = head.shape[-1] // 2                       # static split point
    col = lax.broadcasted_iota(jnp.int32, head.shape, 1)
    head_ref[...] = jnp.where(col < a_p, head,
                              jnp.clip(head, LOG_SIG_MIN, LOG_SIG_MAX))

    h_ref[...] = h.astype(h_ref.dtype)              # bf16 write-back
    rnnin_ref[...] = rnn_in.astype(rnnin_ref.dtype)  # bf16 write-back


# -----------------------------------------------------------------------------
# One-time parameter preparation (padding, fusion, bf16 casting)
# -----------------------------------------------------------------------------
def prepare_actor_params(params):
    Din, H = params["w1"].shape
    A = params["wm"].shape[1]

    Din_p = _round_up(Din, 128)
    H_p = _round_up(H, 128)
    # Pack the two heads into a single 128-lane slab when A <= 64.
    A_p = 64 if A <= 64 else _round_up(A, 128)

    def pad2(x, rows, cols):
        return jnp.pad(x, ((0, rows - x.shape[0]), (0, cols - x.shape[1])))

    prepared = {
        "w1": pad2(params["w1"], Din_p, H_p).astype(jnp.bfloat16),
        "b1": pad2(params["b1"], 1, H_p).astype(jnp.float32),
        "wih": pad2(params["wih"], H_p, H_p).astype(jnp.bfloat16),
        "whh": pad2(params["whh"], H_p, H_p).astype(jnp.bfloat16),
        # pre-summed RNN bias
        "brnn": pad2(params["bih"] + params["bhh"], 1, H_p).astype(jnp.float32),
        "whead": jnp.concatenate(
            [pad2(params["wm"], H_p, A_p), pad2(params["wl"], H_p, A_p)],
            axis=1).astype(jnp.bfloat16),                    # (H_p, 2*A_p)
        "bhead": jnp.concatenate(
            [pad2(params["bm"], 1, A_p), pad2(params["bl"], 1, A_p)],
            axis=1).astype(jnp.float32),                     # (1, 2*A_p)
        "dims": (Din, H, A, Din_p, H_p, A_p),
    }
    return prepared


# -----------------------------------------------------------------------------
# Per-step wrapper
# -----------------------------------------------------------------------------
def actor_forward(state, h_prev, prepared):
    """Pallas implementation of Actor.forward(..., sampling=True), T=1."""
    B, T, Din = state.shape
    assert T == 1, "sampling=True path squeezes a length-1 time axis"
    Din_s, H, A, Din_p, H_p, A_p = prepared["dims"]
    assert Din == Din_s

    # ---- batch tiling: multiples of 16 (packed bf16 sublanes), up to 512 ----
    B_p = _round_up(B, 16)
    if B_p <= 512:
        TM = B_p
    else:
        TM = 512
        B_p = _round_up(B_p, TM)
    grid = (B_p // TM,)

    # ---- activations (bf16 matmul operands), padded ------------------------
    def pad_act(x, rows, cols):
        return jnp.pad(x.astype(jnp.float32),
                       ((0, rows - x.shape[0]), (0, cols - x.shape[1]))
                       ).astype(jnp.bfloat16)

    s2 = pad_act(state.reshape(B, Din), B_p, Din_p)
    h2 = pad_act(h_prev.reshape(B, H), B_p, H_p)

    # ---- specs: stream batch blocks, keep weights resident ------------------
    batch_spec = lambda cols: pl.BlockSpec((TM, cols), lambda i: (i, 0))
    resident = lambda shape: pl.BlockSpec(shape, lambda i: (0, 0))

    in_specs = [
        batch_spec(Din_p),                 # state
        batch_spec(H_p),                   # h_prev
        resident((Din_p, H_p)),            # w1
        resident((1, H_p)),                # b1
        resident((H_p, H_p)),              # wih
        resident((H_p, H_p)),              # whh
        resident((1, H_p)),                # brnn (pre-summed)
        resident((H_p, 2 * A_p)),          # whead
        resident((1, 2 * A_p)),            # bhead
    ]
    out_shapes = (
        jax.ShapeDtypeStruct((B_p, H_p), jnp.bfloat16),      # h
        jax.ShapeDtypeStruct((B_p, H_p), jnp.bfloat16),      # rnn_in
        jax.ShapeDtypeStruct((B_p, 2 * A_p), jnp.float32),   # [mean | log_std]
    )
    out_specs = (batch_spec(H_p), batch_spec(H_p), batch_spec(2 * A_p))

    flops = 2 * B_p * (Din_p * H_p + 2 * H_p * H_p + H_p * 2 * A_p)
    bytes_accessed = (
        2 * (Din_p * H_p + 2 * H_p * H_p + H_p * 2 * A_p)    # bf16 weights
        + 4 * (2 * H_p + 2 * A_p)                            # f32 biases
        + 2 * B_p * (Din_p + H_p)                            # bf16 activations in
        + 2 * B_p * 2 * H_p                                  # bf16 h / rnn_in out
        + 4 * B_p * 2 * A_p                                  # f32 head out
    )
    cost = pl.CostEstimate(flops=flops,
                           transcendentals=2 * B_p * H_p,
                           bytes_accessed=bytes_accessed)

    h_pad, rnnin_pad, head_pad = pl.pallas_call(
        actor_forward_kernel,
        out_shape=out_shapes,
        grid=grid,
        in_specs=in_specs,
        out_specs=out_specs,
        compiler_params=pltpu.CompilerParams(
            dimension_semantics=("parallel",),
        ),
        cost_estimate=cost,
    )(s2, h2,
      prepared["w1"], prepared["b1"],
      prepared["wih"], prepared["whh"], prepared["brnn"],
      prepared["whead"], prepared["bhead"])

    # ---- unpad / unfuse and match PyTorch output shapes ---------------------
    mean = head_pad[:B, :A]
    log_std = head_pad[:B, A_p:A_p + A]
    h2d = h_pad[:B, :H].astype(jnp.float32)
    rnn_in = rnnin_pad[:B, :H].astype(jnp.float32)

    # mean, log_std: (B, A); h_current: (1, B, H); x: (B, H); rnn_in: (B, 1, H)
    return mean, log_std, h2d.reshape(1, B, H), h2d, rnn_in.reshape(B, 1, H)


# -----------------------------------------------------------------------------
# Synthetic params + pure-JAX reference
# -----------------------------------------------------------------------------
def init_actor_params(key, num_inputs, num_actions, hidden_dim):
    """Deterministic synthetic init mirroring the module's __init__ shapes.

    Linear layers: xavier_uniform weights / zero bias (weights_init_);
    RNN weights: PyTorch default U(-1/sqrt(H), 1/sqrt(H)).
    Weights stored transposed: (in_features, out_features).
    """
    ks = jax.random.split(key, 6)

    def xavier(k, fan_in, fan_out):
        bound = jnp.sqrt(6.0 / (fan_in + fan_out))
        return jax.random.uniform(k, (fan_in, fan_out), jnp.float32, -bound, bound)

    rnn_bound = 1.0 / jnp.sqrt(jnp.float32(hidden_dim))

    def rnn_w(k, fan_in, fan_out):
        return jax.random.uniform(k, (fan_in, fan_out), jnp.float32, -rnn_bound, rnn_bound)

    def rnn_b(k, n):
        return jax.random.uniform(k, (1, n), jnp.float32, -rnn_bound, rnn_bound)

    return {
        "w1": xavier(ks[0], num_inputs, hidden_dim),
        "b1": jnp.zeros((1, hidden_dim), jnp.float32),
        "wih": rnn_w(ks[1], hidden_dim, hidden_dim),
        "bih": rnn_b(ks[2], hidden_dim),
        "whh": rnn_w(ks[3], hidden_dim, hidden_dim),
        "bhh": rnn_b(ks[4], hidden_dim),
        "wm": xavier(ks[5], hidden_dim, num_actions),
        "bm": jnp.zeros((1, num_actions), jnp.float32),
        "wl": xavier(jax.random.fold_in(key, 99), hidden_dim, num_actions),
        "bl": jnp.zeros((1, num_actions), jnp.float32),
    }


def _reference_forward(state, h_prev, p):
    """Pure-JAX f32 reference (same math) for correctness checking."""
    B, T, Din = state.shape
    s = state.reshape(B, Din)
    h0 = h_prev.reshape(B, -1)
    rnn_in = jnp.tanh(s @ p["w1"] + p["b1"])
    h = jnp.tanh(rnn_in @ p["wih"] + p["bih"] + h0 @ p["whh"] + p["bhh"])
    mean = h @ p["wm"] + p["bm"]
    log_std = jnp.clip(h @ p["wl"] + p["bl"], LOG_SIG_MIN, LOG_SIG_MAX)
    return mean, log_std, h, rnn_in


# TODO(synk): the sampling==False branch (pack_padded_sequence over variable-
# length sequences + boolean masking in .sample) has no clean single-kernel
# Pallas equivalent and is not implemented here.

if __name__ == "__main__":
    key = jax.random.PRNGKey(0)
    B, T = 2, 1
    num_inputs, num_actions, hidden_dim = 16, 8, 32

    k_params, k_state, k_h = jax.random.split(key, 3)
    params = init_actor_params(k_params, num_inputs, num_actions, hidden_dim)
    prepared = prepare_actor_params(params)   # one-time weight padding/fusion

    state = jax.random.normal(k_state, (B, T, num_inputs), jnp.float32)
    h_prev = jax.random.normal(k_h, (1, B, hidden_dim), jnp.float32)

    mean, log_std, h_cur, x, rnn_in = actor_forward(state, h_prev, prepared)
    jax.block_until_ready((mean, log_std, h_cur, x, rnn_in))

    # sanity-check against pure-JAX f32 reference (bf16 matmuls -> looser tol)
    r_mean, r_log_std, r_h, r_rnn_in = _reference_forward(state, h_prev, params)
    assert jnp.allclose(mean, r_mean, atol=5e-2, rtol=5e-2)
    assert jnp.allclose(log_std, r_log_std, atol=5e-2, rtol=5e-2)
    assert jnp.allclose(h_cur.reshape(B, hidden_dim), r_h, atol=5e-2, rtol=5e-2)
    assert jnp.allclose(x, r_h, atol=5e-2, rtol=5e-2)
    assert jnp.allclose(rnn_in.reshape(B, hidden_dim), r_rnn_in, atol=5e-2, rtol=5e-2)
    assert mean.shape == (B, num_actions)
    assert log_std.shape == (B, num_actions)
    assert h_cur.shape == (1, B, hidden_dim)
    assert x.shape == (B, hidden_dim)
    assert rnn_in.shape == (B, 1, num_actions) if False else rnn_in.shape == (B, 1, hidden_dim)

    print("KERNEL_OK")
</pallas_src>

<mosaic_0001>
module attributes {stable_mosaic.version = 11 : i64} {
  func.func @actor_forward_kernel(%arg0: i32, %arg1: memref<16x128xbf16, #tpu.memory_space<vmem>>, %arg2: memref<16x128xbf16, #tpu.memory_space<vmem>>, %arg3: memref<128x128xbf16, #tpu.memory_space<vmem>>, %arg4: memref<1x128xf32, #tpu.memory_space<vmem>>, %arg5: memref<128x128xbf16, #tpu.memory_space<vmem>>, %arg6: memref<128x128xbf16, #tpu.memory_space<vmem>>, %arg7: memref<1x128xf32, #tpu.memory_space<vmem>>, %arg8: memref<128x128xbf16, #tpu.memory_space<vmem>>, %arg9: memref<1x128xf32, #tpu.memory_space<vmem>>, %arg10: memref<16x128xbf16, #tpu.memory_space<vmem>>, %arg11: memref<16x128xbf16, #tpu.memory_space<vmem>>, %arg12: memref<16x128xf32, #tpu.memory_space<vmem>>) attributes {dimension_semantics = [#tpu.dimension_semantics<parallel>], iteration_bounds = array<i64: 1>, scalar_prefetch = 0 : i64, scratch_operands = 0 : i64, tpu.core_type = #tpu.core_type<tc>, window_params = [{transform_indices = @transform_0, window_bounds = array<i64: 16, 128>}, {transform_indices = @transform_1, window_bounds = array<i64: 16, 128>}, {pipeline_mode = #tpu.pipeline_mode<synchronous>, transform_indices = @transform_2, window_bounds = array<i64: 128, 128>}, {pipeline_mode = #tpu.pipeline_mode<synchronous>, transform_indices = @transform_3, window_bounds = array<i64: 1, 128>}, {pipeline_mode = #tpu.pipeline_mode<synchronous>, transform_indices = @transform_4, window_bounds = array<i64: 128, 128>}, {pipeline_mode = #tpu.pipeline_mode<synchronous>, transform_indices = @transform_5, window_bounds = array<i64: 128, 128>}, {pipeline_mode = #tpu.pipeline_mode<synchronous>, transform_indices = @transform_6, window_bounds = array<i64: 1, 128>}, {pipeline_mode = #tpu.pipeline_mode<synchronous>, transform_indices = @transform_7, window_bounds = array<i64: 128, 128>}, {pipeline_mode = #tpu.pipeline_mode<synchronous>, transform_indices = @transform_8, window_bounds = array<i64: 1, 128>}, {transform_indices = @transform_9, window_bounds = array<i64: 16, 128>}, {transform_indices = @transform_10, window_bounds = array<i64: 16, 128>}, {transform_indices = @transform_11, window_bounds = array<i64: 16, 128>}]} {
    %c0 = arith.constant 0 : index
    %c0_0 = arith.constant 0 : index
    %0 = vector.load %arg1[%c0, %c0_0] : memref<16x128xbf16, #tpu.memory_space<vmem>>, vector<16x128xbf16>
    %c0_1 = arith.constant 0 : index
    %c0_2 = arith.constant 0 : index
    %1 = vector.load %arg2[%c0_1, %c0_2] : memref<16x128xbf16, #tpu.memory_space<vmem>>, vector<16x128xbf16>
    %c0_3 = arith.constant 0 : index
    %c0_4 = arith.constant 0 : index
    %2 = vector.load %arg3[%c0_3, %c0_4] : memref<128x128xbf16, #tpu.memory_space<vmem>>, vector<128x128xbf16>
    %cst = arith.constant dense<0.000000e+00> : vector<16x128xf32>
    %3 = tpu.matmul %0, %2, %cst {dimension_numbers = #tpu.dot_dimension_numbers<[1], [0], [0], [1], [0, 0, 1, 1], [], []>} : vector<16x128xbf16>, vector<128x128xbf16>, vector<16x128xf32> -> vector<16x128xf32>
    %c0_5 = arith.constant 0 : index
    %c0_6 = arith.constant 0 : index
    %4 = vector.load %arg4[%c0_5, %c0_6] : memref<1x128xf32, #tpu.memory_space<vmem>>, vector<1x128xf32>
    %5 = vector.broadcast %4 : vector<1x128xf32> to vector<16x128xf32>
    %6 = arith.addf %3, %5 : vector<16x128xf32>
    %7 = math.tanh %6 : vector<16x128xf32>
    %8 = arith.truncf %7 : vector<16x128xf32> to vector<16x128xbf16>
    %c0_7 = arith.constant 0 : index
    %c0_8 = arith.constant 0 : index
    %9 = vector.load %arg5[%c0_7, %c0_8] : memref<128x128xbf16, #tpu.memory_space<vmem>>, vector<128x128xbf16>
    %cst_9 = arith.constant dense<0.000000e+00> : vector<16x128xf32>
    %10 = tpu.matmul %8, %9, %cst_9 {dimension_numbers = #tpu.dot_dimension_numbers<[1], [0], [0], [1], [0, 0, 1, 1], [], []>} : vector<16x128xbf16>, vector<128x128xbf16>, vector<16x128xf32> -> vector<16x128xf32>
    %c0_10 = arith.constant 0 : index
    %c0_11 = arith.constant 0 : index
    %11 = vector.load %arg6[%c0_10, %c0_11] : memref<128x128xbf16, #tpu.memory_space<vmem>>, vector<128x128xbf16>
    %cst_12 = arith.constant dense<0.000000e+00> : vector<16x128xf32>
    %12 = tpu.matmul %1, %11, %cst_12 {dimension_numbers = #tpu.dot_dimension_numbers<[1], [0], [0], [1], [0, 0, 1, 1], [], []>} : vector<16x128xbf16>, vector<128x128xbf16>, vector<16x128xf32> -> vector<16x128xf32>
    %13 = arith.addf %10, %12 : vector<16x128xf32>
    %c0_13 = arith.constant 0 : index
    %c0_14 = arith.constant 0 : index
    %14 = vector.load %arg7[%c0_13, %c0_14] : memref<1x128xf32, #tpu.memory_space<vmem>>, vector<1x128xf32>
    %15 = vector.broadcast %14 : vector<1x128xf32> to vector<16x128xf32>
    %16 = arith.addf %13, %15 : vector<16x128xf32>
    %17 = math.tanh %16 : vector<16x128xf32>
    %18 = arith.truncf %17 : vector<16x128xf32> to vector<16x128xbf16>
    %c0_15 = arith.constant 0 : index
    %c0_16 = arith.constant 0 : index
    %19 = vector.load %arg8[%c0_15, %c0_16] : memref<128x128xbf16, #tpu.memory_space<vmem>>, vector<128x128xbf16>
    %cst_17 = arith.constant dense<0.000000e+00> : vector<16x128xf32>
    %20 = tpu.matmul %18, %19, %cst_17 {dimension_numbers = #tpu.dot_dimension_numbers<[1], [0], [0], [1], [0, 0, 1, 1], [], []>} : vector<16x128xbf16>, vector<128x128xbf16>, vector<16x128xf32> -> vector<16x128xf32>
    %c0_18 = arith.constant 0 : index
    %c0_19 = arith.constant 0 : index
    %21 = vector.load %arg9[%c0_18, %c0_19] : memref<1x128xf32, #tpu.memory_space<vmem>>, vector<1x128xf32>
    %22 = vector.broadcast %21 : vector<1x128xf32> to vector<16x128xf32>
    %23 = arith.addf %20, %22 : vector<16x128xf32>
    %24 = tpu.iota {dimensions = array<i32: 1>} : vector<16x128xi32>
    %c64_i32 = arith.constant 64 : i32
    %25 = vector.broadcast %c64_i32 : i32 to vector<16x128xi32>
    %26 = arith.cmpi slt, %24, %25 : vector<16x128xi32>
    %cst_20 = arith.constant -2.000000e+01 : f32
    %cst_21 = arith.constant 2.000000e+00 : f32
    %27 = vector.broadcast %cst_20 : f32 to vector<16x128xf32>
    %28 = arith.maximumf %27, %23 : vector<16x128xf32>
    %29 = vector.broadcast %cst_21 : f32 to vector<16x128xf32>
    %30 = arith.minimumf %29, %28 : vector<16x128xf32>
    %31 = arith.select %26, %23, %30 : vector<16x128xi1>, vector<16x128xf32>
    %c0_22 = arith.constant 0 : index
    %c0_23 = arith.constant 0 : index
    %32 = vector.load %arg12[%c0_22, %c0_23] : memref<16x128xf32, #tpu.memory_space<vmem>>, vector<16x128xf32>
    tpu.vector_store %arg12[%c0_22, %c0_23], %31 {strides = array<i32>} : memref<16x128xf32, #tpu.memory_space<vmem>>, vector<16x128xf32>,
    %33 = arith.truncf %17 : vector<16x128xf32> to vector<16x128xbf16>
    %c0_24 = arith.constant 0 : index
    %c0_25 = arith.constant 0 : index
    %34 = vector.load %arg10[%c0_24, %c0_25] : memref<16x128xbf16, #tpu.memory_space<vmem>>, vector<16x128xbf16>
    tpu.vector_store %arg10[%c0_24, %c0_25], %33 {strides = array<i32>} : memref<16x128xbf16, #tpu.memory_space<vmem>>, vector<16x128xbf16>,
    %35 = arith.truncf %7 : vector<16x128xf32> to vector<16x128xbf16>
    %c0_26 = arith.constant 0 : index
    %c0_27 = arith.constant 0 : index
    %36 = vector.load %arg11[%c0_26, %c0_27] : memref<16x128xbf16, #tpu.memory_space<vmem>>, vector<16x128xbf16>
    tpu.vector_store %arg11[%c0_26, %c0_27], %35 {strides = array<i32>} : memref<16x128xbf16, #tpu.memory_space<vmem>>, vector<16x128xbf16>,
    return
  }
  func.func @transform_0(%arg0: i32) -> (i32, i32) {
    %c0_i32 = arith.constant 0 : i32
    %c0_i32_0 = arith.constant 0 : i32
    return %arg0, %c0_i32 : i32, i32
  }
  func.func @transform_1(%arg0: i32) -> (i32, i32) {
    %c0_i32 = arith.constant 0 : i32
    %c0_i32_0 = arith.constant 0 : i32
    return %arg0, %c0_i32 : i32, i32
  }
  func.func @transform_2(%arg0: i32) -> (i32, i32) {
    %c0_i32 = arith.constant 0 : i32
    %c0_i32_0 = arith.constant 0 : i32
    %c0_i32_1 = arith.constant 0 : i32
    return %c0_i32, %c0_i32_0 : i32, i32
  }
  func.func @transform_3(%arg0: i32) -> (i32, i32) {
    %c0_i32 = arith.constant 0 : i32
    %c0_i32_0 = arith.constant 0 : i32
    %c0_i32_1 = arith.constant 0 : i32
    return %c0_i32, %c0_i32_0 : i32, i32
  }
  func.func @transform_4(%arg0: i32) -> (i32, i32) {
    %c0_i32 = arith.constant 0 : i32
    %c0_i32_0 = arith.constant 0 : i32
    %c0_i32_1 = arith.constant 0 : i32
    return %c0_i32, %c0_i32_0 : i32, i32
  }
  func.func @transform_5(%arg0: i32) -> (i32, i32) {
    %c0_i32 = arith.constant 0 : i32
    %c0_i32_0 = arith.constant 0 : i32
    %c0_i32_1 = arith.constant 0 : i32
    return %c0_i32, %c0_i32_0 : i32, i32
  }
  func.func @transform_6(%arg0: i32) -> (i32, i32) {
    %c0_i32 = arith.constant 0 : i32
    %c0_i32_0 = arith.constant 0 : i32
    %c0_i32_1 = arith.constant 0 : i32
    return %c0_i32, %c0_i32_0 : i32, i32
  }
  func.func @transform_7(%arg0: i32) -> (i32, i32) {
    %c0_i32 = arith.constant 0 : i32
    %c0_i32_0 = arith.constant 0 : i32
    %c0_i32_1 = arith.constant 0 : i32
    return %c0_i32, %c0_i32_0 : i32, i32
  }
  func.func @transform_8(%arg0: i32) -> (i32, i32) {
    %c0_i32 = arith.constant 0 : i32
    %c0_i32_0 = arith.constant 0 : i32
    %c0_i32_1 = arith.constant 0 : i32
    return %c0_i32, %c0_i32_0 : i32, i32
  }
  func.func @transform_9(%arg0: i32) -> (i32, i32) {
    %c0_i32 = arith.constant 0 : i32
    %c0_i32_0 = arith.constant 0 : i32
    return %arg0, %c0_i32 : i32, i32
  }
  func.func @transform_10(%arg0: i32) -> (i32, i32) {
    %c0_i32 = arith.constant 0 : i32
    %c0_i32_0 = arith.constant 0 : i32
    return %arg0, %c0_i32 : i32, i32
  }
  func.func @transform_11(%arg0: i32) -> (i32, i32) {
    %c0_i32 = arith.constant 0 : i32
    %c0_i32_0 = arith.constant 0 : i32
    return %arg0, %c0_i32 : i32, i32
  }
}

</mosaic_0001>

<llo_original>
// kernel: tpu_custom_call.1
$region0: #{tpu_custom_call.1}
  #allocation0 [shape = 'u32[]', space=smem, size = 0x4, offset = 0x4, fixed_abs, tag = 'smem constant byte address 0x4 - core index']
  #allocation1 [shape = 'u32[144,128]{1,0:T(1,128)}', space=vmem, size = 0x12000, scoped, tag = 'internal scratch']
  %s0 = inlined_call_operand.hbm [shape: bf16[16,128], index: 0, kind: input, shape index: {}]
  %s1 = inlined_call_operand.hbm [shape: bf16[16,128], index: 1, kind: input, shape index: {}]
  %s2 = inlined_call_operand.hbm [shape: bf16[128,128], index: 2, kind: input, shape index: {}]
  %s3 = inlined_call_operand.vmem [shape: f32[1,128], index: 3, kind: input, shape index: {}]
  %s4 = inlined_call_operand.hbm [shape: bf16[128,128], index: 4, kind: input, shape index: {}]
  %s5 = inlined_call_operand.hbm [shape: bf16[128,128], index: 5, kind: input, shape index: {}]
  %s6 = inlined_call_operand.vmem [shape: f32[1,128], index: 6, kind: input, shape index: {}]
  %s7 = inlined_call_operand.hbm [shape: bf16[128,128], index: 7, kind: input, shape index: {}]
  %s8 = inlined_call_operand.vmem [shape: f32[1,128], index: 8, kind: input, shape index: {}]
  %s9 = inlined_call_operand.hbm [shape: bf16[16,128], index: 9, kind: output, shape index: {0}]
  %s10 = inlined_call_operand.hbm [shape: bf16[16,128], index: 10, kind: output, shape index: {1}]
  %s11 = inlined_call_operand.hbm [shape: f32[16,128], index: 11, kind: output, shape index: {2}]
  %12 = xla_tuple %s9, %s10, %s11
  %s13 = sld [smem:[#allocation0]]
  $region86: #{tpu_custom_call.1} parent=0
    _
  %s15 = ssub.s32 1, %s13
  %s16 = scalar_select 0, %s15, %s13
  $region1: #{tpu_custom_call.1} parent=0
    #allocation2 [shape = 'u8[4096]{0}', space=vmem, size = 0x1000, scoped, tag = 'input window, operand 0, single buffered']
    #allocation3 [shape = 's32[1]{0}', space=sflag, size = 0x4, scoped, tag = 'scoped memory for tpu_custom_call.1']
    #allocation4 [shape = 's32[1]{0}', space=sflag, size = 0x4, scoped, tag = 'scoped memory for tpu_custom_call.1']
    #allocation5 [shape = 'u8[4096]{0}', space=vmem, size = 0x1000, scoped, tag = 'input window, operand 1, single buffered']
    #allocation6 [shape = 's32[1]{0}', space=sflag, size = 0x4, scoped, tag = 'scoped memory for tpu_custom_call.1']
    #allocation7 [shape = 'u8[32768]{0}', space=vmem, size = 0x8000, scoped, tag = 'input window, operand 2, single buffered']
    #allocation8 [shape = 'u8[32768]{0}', space=vmem, size = 0x8000, scoped, tag = 'input window, operand 4, single buffered']
    #allocation9 [shape = 's32[1]{0}', space=sflag, size = 0x4, scoped, tag = 'scoped memory for tpu_custom_call.1']
    #allocation10 [shape = 'u8[32768]{0}', space=vmem, size = 0x8000, scoped, tag = 'input window, operand 5, single buffered']
    #allocation11 [shape = 'u8[32768]{0}', space=vmem, size = 0x8000, scoped, tag = 'input window, operand 7, single buffered']
    #allocation12 [shape = 's32[1]{0}', space=sflag, size = 0x4, scoped, tag = 'scoped memory for tpu_custom_call.1']
    #allocation13 [shape = 'u8[4096]{0}', space=vmem, size = 0x1000, scoped, tag = 'output window, operand 0, single buffered']
    #allocation14 [shape = 'u8[4096]{0}', space=vmem, size = 0x1000, scoped, tag = 'output window, operand 1, single buffered']
    #allocation15 [shape = 's32[1]{0}', space=sflag, size = 0x4, scoped, tag = 'scoped memory for tpu_custom_call.1']
    #allocation16 [shape = 'u8[8192]{0}', space=vmem, size = 0x2000, scoped, tag = 'output window, operand 2, single buffered']
    %17 = vsyncpa [#allocation3], 0
    %18 = vsyncpa [#allocation6], 0
    %19 = vsyncpa [#allocation9], 0
    %20 = vsyncpa [#allocation12], 0
    %21 = vsyncpa [#allocation4], 0
    %22 = vsyncpa [#allocation15], 0
    // Predicated region
    $region2: #{tpu_custom_call.1} parent=1 // pred_check
      _
    $region3: #{tpu_custom_call.1} parent=1 // pred_check_branch
      %24 = sbr.rel (0) target = $region5
    $region4: #{tpu_custom_call.1} parent=1 // pred_region
      %s26 = ssub.s32 128, 128
      %27 = vsyncadd [#allocation3], %s26
      %s28 = sshll.u32 [#allocation2], 4
      %s29 = int_to_ptr.vmem [resolvable:$true] %s28
      %34 = dma.hbm_to_vmem [thread:$0]  %s0, 128, %s29, [#allocation3], 64, 64, 4
    $region5: #{tpu_custom_call.1} parent=1 // pred_fallthru
      _
    // Predicated region
    $region6: #{tpu_custom_call.1} parent=1 // pred_check
      _
    $region7: #{tpu_custom_call.1} parent=1 // pred_check_branch
      %36 = sbr.rel (0) target = $region9
    $region8: #{tpu_custom_call.1} parent=1 // pred_region
      %s38 = ssub.s32 128, 128
      %39 = vsyncadd [#allocation6], %s38
      %s40 = sshll.u32 [#allocation5], 4
      %s41 = int_to_ptr.vmem [resolvable:$true] %s40
      %46 = dma.hbm_to_vmem [thread:$0]  %s1, 128, %s41, [#allocation6], 64, 64, 4
    $region9: #{tpu_custom_call.1} parent=1 // pred_fallthru
      _
    // Predicated region
    $region10: #{tpu_custom_call.1} parent=1 // pred_check
      _
    $region11: #{tpu_custom_call.1} parent=1 // pred_check_branch
      %48 = sbr.rel (0) target = $region13
    $region12: #{tpu_custom_call.1} parent=1 // pred_region
      %s50 = ssub.s32 1024, 1024
      %51 = vsyncadd [#allocation6], %s50
      %s52 = sshll.u32 [#allocation7], 4
      %s53 = int_to_ptr.vmem [resolvable:$true] %s52
      %58 = dma.hbm_to_vmem [thread:$0]  %s2, 1024, %s53, [#allocation6], 64, 64, 4
    $region13: #{tpu_custom_call.1} parent=1 // pred_fallthru
      _
    // Predicated region
    $region14: #{tpu_custom_call.1} parent=1 // pred_check
      _
    $region15: #{tpu_custom_call.1} parent=1 // pred_check_branch
      %60 = sbr.rel (0) target = $region17
    $region16: #{tpu_custom_call.1} parent=1 // pred_region
      _
    $region17: #{tpu_custom_call.1} parent=1 // pred_fallthru
      _
    // Predicated region
    $region18: #{tpu_custom_call.1} parent=1 // pred_check
      _
    $region19: #{tpu_custom_call.1} parent=1 // pred_check_branch
      %62 = sbr.rel (0) target = $region21
    $region20: #{tpu_custom_call.1} parent=1 // pred_region
      %s64 = ssub.s32 1024, 1024
      %65 = vsyncadd [#allocation9], %s64
      %s66 = sshll.u32 [#allocation8], 4
      %s67 = int_to_ptr.vmem [resolvable:$true] %s66
      %72 = dma.hbm_to_vmem [thread:$0]  %s4, 1024, %s67, [#allocation9], 64, 64, 4
    $region21: #{tpu_custom_call.1} parent=1 // pred_fallthru
      _
    // Predicated region
    $region22: #{tpu_custom_call.1} parent=1 // pred_check
      _
    $region23: #{tpu_custom_call.1} parent=1 // pred_check_branch
      %74 = sbr.rel (0) target = $region25
    $region24: #{tpu_custom_call.1} parent=1 // pred_region
      %s76 = ssub.s32 1024, 1024
      %77 = vsyncadd [#allocation9], %s76
      %s78 = sshll.u32 [#allocation10], 4
      %s79 = int_to_ptr.vmem [resolvable:$true] %s78
      %84 = dma.hbm_to_vmem [thread:$0]  %s5, 1024, %s79, [#allocation9], 64, 64, 4
    $region25: #{tpu_custom_call.1} parent=1 // pred_fallthru
      _
    // Predicated region
    $region26: #{tpu_custom_call.1} parent=1 // pred_check
      _
    $region27: #{tpu_custom_call.1} parent=1 // pred_check_branch
      %86 = sbr.rel (0) target = $region29
    $region28: #{tpu_custom_call.1} parent=1 // pred_region
      _
    $region29: #{tpu_custom_call.1} parent=1 // pred_fallthru
      _
    // Predicated region
    $region30: #{tpu_custom_call.1} parent=1 // pred_check
      _
    $region31: #{tpu_custom_call.1} parent=1 // pred_check_branch
      %88 = sbr.rel (0) target = $region33
    $region32: #{tpu_custom_call.1} parent=1 // pred_region
      %s90 = ssub.s32 1024, 1024
      %91 = vsyncadd [#allocation12], %s90
      %s92 = sshll.u32 [#allocation11], 4
      %s93 = int_to_ptr.vmem [resolvable:$true] %s92
      %98 = dma.hbm_to_vmem [thread:$0]  %s7, 1024, %s93, [#allocation12], 64, 64, 4
    $region33: #{tpu_custom_call.1} parent=1 // pred_fallthru
      _
    // Predicated region
    $region34: #{tpu_custom_call.1} parent=1 // pred_check
      _
    $region35: #{tpu_custom_call.1} parent=1 // pred_check_branch
      %100 = sbr.rel (0) target = $region37
    $region36: #{tpu_custom_call.1} parent=1 // pred_region
      _
    $region37: #{tpu_custom_call.1} parent=1 // pred_fallthru
      _
    // Predicated region
    $region38: #{tpu_custom_call.1} parent=1 // pred_check
      _
    $region39: #{tpu_custom_call.1} parent=1 // pred_check_branch
      %102 = sbr.rel (0) target = $region41
    $region40: #{tpu_custom_call.1} parent=1 // pred_region
      %103 = dma.done [#allocation3], 128
    $region41: #{tpu_custom_call.1} parent=1 // pred_fallthru
      _
    // Predicated region
    $region42: #{tpu_custom_call.1} parent=1 // pred_check
      _
    $region43: #{tpu_custom_call.1} parent=1 // pred_check_branch
      %105 = sbr.rel (0) target = $region45
    $region44: #{tpu_custom_call.1} parent=1 // pred_region
      %106 = dma.done [#allocation6], 128
    $region45: #{tpu_custom_call.1} parent=1 // pred_fallthru
      _
    // Predicated region
    $region46: #{tpu_custom_call.1} parent=1 // pred_check
      _
    $region47: #{tpu_custom_call.1} parent=1 // pred_check_branch
      %108 = sbr.rel (0) target = $region49
    $region48: #{tpu_custom_call.1} parent=1 // pred_region
      %109 = dma.done [#allocation6], 1024
    $region49: #{tpu_custom_call.1} parent=1 // pred_fallthru
      _
    // Predicated region
    $region50: #{tpu_custom_call.1} parent=1 // pred_check
      _
    $region51: #{tpu_custom_call.1} parent=1 // pred_check_branch
      %111 = sbr.rel (0) target = $region53
    $region52: #{tpu_custom_call.1} parent=1 // pred_region
      %112 = dma.done [#allocation9], 1024
    $region53: #{tpu_custom_call.1} parent=1 // pred_fallthru
      _
    // Predicated region
    $region54: #{tpu_custom_call.1} parent=1 // pred_check
      _
    $region55: #{tpu_custom_call.1} parent=1 // pred_check_branch
      %114 = sbr.rel (0) target = $region57
    $region56: #{tpu_custom_call.1} parent=1 // pred_region
      %115 = dma.done [#allocation9], 1024
    $region57: #{tpu_custom_call.1} parent=1 // pred_fallthru
      _
    // Predicated region
    $region58: #{tpu_custom_call.1} parent=1 // pred_check
      _
    $region59: #{tpu_custom_call.1} parent=1 // pred_check_branch
      %117 = sbr.rel (0) target = $region61
    $region60: #{tpu_custom_call.1} parent=1 // pred_region
      %118 = dma.done [#allocation12], 1024
    $region61: #{tpu_custom_call.1} parent=1 // pred_fallthru
      _
    %v120 = vld [vmem:[#allocation2] sm:$0xf]
    %v121 = vld [vmem:[#allocation2 + $0x4] sm:$0xf]
    %v122 = vld [vmem:[#allocation5] sm:$0xf]
    %v123 = vld [vmem:[#allocation5 + $0x4] sm:$0xf]
    %v124 = vld [vmem:[#allocation7] sm:$0xf]
    %v125 = vld [vmem:[#allocation7 + $0x4] sm:$0xf]
    %v126 = vld [vmem:[#allocation7 + $0x8] sm:$0xf]
    %v127 = vld [vmem:[#allocation7 + $0xc] sm:$0xf]
    %v128 = vld [vmem:[#allocation7 + $0x10] sm:$0xf]
    %v129 = vld [vmem:[#allocation7 + $0x14] sm:$0xf]
    %v130 = vld [vmem:[#allocation7 + $0x18] sm:$0xf]
    %v131 = vld [vmem:[#allocation7 + $0x1c] sm:$0xf]
    %v132 = vld [vmem:[#allocation7 + $0x20] sm:$0xf]
    %v133 = vld [vmem:[#allocation7 + $0x24] sm:$0xf]
    %v134 = vld [vmem:[#allocation7 + $0x28] sm:$0xf]
    %v135 = vld [vmem:[#allocation7 + $0x2c] sm:$0xf]
    %v136 = vld [vmem:[#allocation7 + $0x30] sm:$0xf]
    %v137 = vld [vmem:[#allocation7 + $0x34] sm:$0xf]
    %v138 = vld [vmem:[#allocation7 + $0x38] sm:$0xf]
    %v139 = vld [vmem:[#allocation7 + $0x3c] sm:$0xf]
    %v140 = vld [vmem:[%s3] sm:$0x1]
    %v142 = vlaneseq
    %v143 = vshrl.u32 %v142, 7
    %v144 = vsub.s32 0, %v143
    %v145 = vrot.slane %v140, %v144
    %v149 = vunpack.c.l.b16 %v120
    %v150 = vunpack.c.l.b16 %v121
    %v151 = vpack.c.b16 %v150, %v149
    %v169 = vunpack.c.l.b16 %v124
    %v170 = vunpack.c.l.b16 %v125
    %v171 = vunpack.c.l.b16 %v126
    %v172 = vunpack.c.l.b16 %v127
    %v173 = vunpack.c.l.b16 %v128
    %v174 = vunpack.c.l.b16 %v129
    %v175 = vunpack.c.l.b16 %v130
    %v176 = vunpack.c.l.b16 %v131
    %v177 = vunpack.c.l.b16 %v132
    %v178 = vunpack.c.l.b16 %v133
    %v179 = vunpack.c.l.b16 %v134
    %v180 = vunpack.c.l.b16 %v135
    %v181 = vunpack.c.l.b16 %v136
    %v182 = vunpack.c.l.b16 %v137
    %v183 = vunpack.c.l.b16 %v138
    %v184 = vunpack.c.l.b16 %v139
    %v185 = vpack.c.b16 %v170, %v169
    %v186 = vpack.c.b16 %v172, %v171
    %v187 = vpack.c.b16 %v174, %v173
    %v188 = vpack.c.b16 %v176, %v175
    %v189 = vpack.c.b16 %v178, %v177
    %v190 = vpack.c.b16 %v180, %v179
    %v191 = vpack.c.b16 %v182, %v181
    %v192 = vpack.c.b16 %v184, %v183
    %201 = vmatprep.subr.bf16.mxu0 0
    %202 = vmatpush1.bf16.msra.mxu0 %v192
    %203 = vmatprep.subr.bf16.mxu0 0
    %204 = vmatpush1.bf16.msra.mxu0 %v191
    %205 = vmatprep.subr.bf16.mxu0 0
    %206 = vmatpush1.bf16.msra.mxu0 %v190
    %207 = vmatprep.subr.bf16.mxu0 0
    %208 = vmatpush1.bf16.msra.mxu0 %v189
    %209 = vmatprep.subr.bf16.mxu0 0
    %210 = vmatpush1.bf16.msra.mxu0 %v188
    %211 = vmatprep.subr.bf16.mxu0 0
    %212 = vmatpush1.bf16.msra.mxu0 %v187
    %213 = vmatprep.subr.bf16.mxu0 0
    %214 = vmatpush1.bf16.msra.mxu0 %v186
    %215 = vmatprep.subr.bf16.mxu0 0
    %216 = vmatpush1.bf16.msra.mxu0 %v185
    %217 = vmatprep.subr.bf16.mxu0 0
    %218 = vmatpush2.bf16.msra.mxu0 0
    %219 = vmatprep.subr.bf16.mxu0 0
    %220 = vmatpush2.bf16.msra.mxu0 0
    %221 = vmatprep.subr.bf16.mxu0 0
    %222 = vmatpush2.bf16.msra.mxu0 0
    %223 = vmatprep.subr.bf16.mxu0 0
    %224 = vmatpush2.bf16.msra.mxu0 0
    %225 = vmatprep.subr.bf16.mxu0 0
    %226 = vmatpush2.bf16.msra.mxu0 0
    %227 = vmatprep.subr.bf16.mxu0 0
    %228 = vmatpush2.bf16.msra.mxu0 0
    %229 = vmatprep.subr.bf16.mxu0 0
    %230 = vmatpush2.bf16.msra.mxu0 0
    %231 = vmatprep.subr.bf16.mxu0 0
    %232 = vmatpush2.bf16.msra.mxu0 0
    %233 = vmatprep.mubr.bf16.mxu0 0
    %234 = vmatmul.mubr.bf16.gmra.mxu0 %v151
    %v235 = vpop.f32.mrf.mxu0
    %v236 = vadd.f32 %v145, %v235
    %v237 = vpop.f32.mrf.mxu0
    %v238 = vpop.f32.mrf.mxu0
    %v239 = vadd.f32 %v145, %v238
    %v240 = vpop.f32.mrf.mxu0
    %241 = vdwg.mxu0
    %v242 = vtanh.pop %v236
    %v243 = vtanh.pop %v239
    %v244 = vpack.c.bf16 %v243, %v242
    %v245 = vld [vmem:[#allocation8] sm:$0xf]
    %v246 = vld [vmem:[#allocation8 + $0x4] sm:$0xf]
    %v247 = vld [vmem:[#allocation8 + $0x8] sm:$0xf]
    %v248 = vld [vmem:[#allocation8 + $0xc] sm:$0xf]
    %v249 = vld [vmem:[#allocation8 + $0x10] sm:$0xf]
    %v250 = vld [vmem:[#allocation8 + $0x14] sm:$0xf]
    %v251 = vld [vmem:[#allocation8 + $0x18] sm:$0xf]
    %v252 = vld [vmem:[#allocation8 + $0x1c] sm:$0xf]
    %v253 = vld [vmem:[#allocation8 + $0x20] sm:$0xf]
    %v254 = vld [vmem:[#allocation8 + $0x24] sm:$0xf]
    %v255 = vld [vmem:[#allocation8 + $0x28] sm:$0xf]
    %v256 = vld [vmem:[#allocation8 + $0x2c] sm:$0xf]
    %v257 = vld [vmem:[#allocation8 + $0x30] sm:$0xf]
    %v258 = vld [vmem:[#allocation8 + $0x34] sm:$0xf]
    %v259 = vld [vmem:[#allocation8 + $0x38] sm:$0xf]
    %v260 = vld [vmem:[#allocation8 + $0x3c] sm:$0xf]
    %v261 = vld [vmem:[#allocation10] sm:$0xf]
    %v262 = vld [vmem:[#allocation10 + $0x4] sm:$0xf]
    %v263 = vld [vmem:[#allocation10 + $0x8] sm:$0xf]
    %v264 = vld [vmem:[#allocation10 + $0xc] sm:$0xf]
    %v265 = vld [vmem:[#allocation10 + $0x10] sm:$0xf]
    %v266 = vld [vmem:[#allocation10 + $0x14] sm:$0xf]
    %v267 = vld [vmem:[#allocation10 + $0x18] sm:$0xf]
    %v268 = vld [vmem:[#allocation10 + $0x1c] sm:$0xf]
    %v269 = vld [vmem:[#allocation10 + $0x20] sm:$0xf]
    %v270 = vld [vmem:[#allocation10 + $0x24] sm:$0xf]
    %v271 = vld [vmem:[#allocation10 + $0x28] sm:$0xf]
    %v272 = vld [vmem:[#allocation10 + $0x2c] sm:$0xf]
    %v273 = vld [vmem:[#allocation10 + $0x30] sm:$0xf]
    %v274 = vld [vmem:[#allocation10 + $0x34] sm:$0xf]
    %v275 = vld [vmem:[#allocation10 + $0x38] sm:$0xf]
    %v276 = vld [vmem:[#allocation10 + $0x3c] sm:$0xf]
    %v279 = vunpack.c.l.b16 %v122
    %v280 = vunpack.c.l.b16 %v123
    %v281 = vpack.c.b16 %v280, %v279
    %v299 = vunpack.c.l.b16 %v261
    %v300 = vunpack.c.l.b16 %v262
    %v301 = vunpack.c.l.b16 %v263
    %v302 = vunpack.c.l.b16 %v264
    %v303 = vunpack.c.l.b16 %v265
    %v304 = vunpack.c.l.b16 %v266
    %v305 = vunpack.c.l.b16 %v267
    %v306 = vunpack.c.l.b16 %v268
    %v307 = vunpack.c.l.b16 %v269
    %v308 = vunpack.c.l.b16 %v270
    %v309 = vunpack.c.l.b16 %v271
    %v310 = vunpack.c.l.b16 %v272
    %v311 = vunpack.c.l.b16 %v273
    %v312 = vunpack.c.l.b16 %v274
    %v313 = vunpack.c.l.b16 %v275
    %v314 = vunpack.c.l.b16 %v276
    %v315 = vpack.c.b16 %v300, %v299
    %v316 = vpack.c.b16 %v302, %v301
    %v317 = vpack.c.b16 %v304, %v303
    %v318 = vpack.c.b16 %v306, %v305
    %v319 = vpack.c.b16 %v308, %v307
    %v320 = vpack.c.b16 %v310, %v309
    %v321 = vpack.c.b16 %v312, %v311
    %v322 = vpack.c.b16 %v314, %v313
    %331 = vmatprep.subr.bf16.mxu0 0
    %332 = vmatpush1.bf16.msra.mxu0 %v322
    %333 = vmatprep.subr.bf16.mxu0 0
    %334 = vmatpush1.bf16.msra.mxu0 %v321
    %335 = vmatprep.subr.bf16.mxu0 0
    %336 = vmatpush1.bf16.msra.mxu0 %v320
    %337 = vmatprep.subr.bf16.mxu0 0
    %338 = vmatpush1.bf16.msra.mxu0 %v319
    %339 = vmatprep.subr.bf16.mxu0 0
    %340 = vmatpush1.bf16.msra.mxu0 %v318
    %341 = vmatprep.subr.bf16.mxu0 0
    %342 = vmatpush1.bf16.msra.mxu0 %v317
    %343 = vmatprep.subr.bf16.mxu0 0
    %344 = vmatpush1.bf16.msra.mxu0 %v316
    %345 = vmatprep.subr.bf16.mxu0 0
    %346 = vmatpush1.bf16.msra.mxu0 %v315
    %347 = vmatprep.subr.bf16.mxu0 0
    %348 = vmatpush2.bf16.msra.mxu0 0
    %349 = vmatprep.subr.bf16.mxu0 0
    %350 = vmatpush2.bf16.msra.mxu0 0
    %351 = vmatprep.subr.bf16.mxu0 0
    %352 = vmatpush2.bf16.msra.mxu0 0
    %353 = vmatprep.subr.bf16.mxu0 0
    %354 = vmatpush2.bf16.msra.mxu0 0
    %355 = vmatprep.subr.bf16.mxu0 0
    %356 = vmatpush2.bf16.msra.mxu0 0
    %357 = vmatprep.subr.bf16.mxu0 0
    %358 = vmatpush2.bf16.msra.mxu0 0
    %359 = vmatprep.subr.bf16.mxu0 0
    %360 = vmatpush2.bf16.msra.mxu0 0
    %361 = vmatprep.subr.bf16.mxu0 0
    %362 = vmatpush2.bf16.msra.mxu0 0
    %363 = vmatprep.mubr.bf16.mxu0 0
    %364 = vmatmul.mubr.bf16.gmra.mxu0 %v281
    %v365 = vpop.f32.mrf.mxu0
    %v366 = vadd.f32 0.0, %v365
    %v367 = vpop.f32.mrf.mxu0
    %v368 = vpop.f32.mrf.mxu0
    %v369 = vadd.f32 0.0, %v368
    %v370 = vpop.f32.mrf.mxu0
    %371 = vdwg.mxu0
    %v388 = vunpack.c.l.b16 %v245
    %v389 = vunpack.c.l.b16 %v246
    %v390 = vunpack.c.l.b16 %v247
    %v391 = vunpack.c.l.b16 %v248
    %v392 = vunpack.c.l.b16 %v249
    %v393 = vunpack.c.l.b16 %v250
    %v394 = vunpack.c.l.b16 %v251
    %v395 = vunpack.c.l.b16 %v252
    %v396 = vunpack.c.l.b16 %v253
    %v397 = vunpack.c.l.b16 %v254
    %v398 = vunpack.c.l.b16 %v255
    %v399 = vunpack.c.l.b16 %v256
    %v400 = vunpack.c.l.b16 %v257
    %v401 = vunpack.c.l.b16 %v258
    %v402 = vunpack.c.l.b16 %v259
    %v403 = vunpack.c.l.b16 %v260
    %v404 = vpack.c.b16 %v389, %v388
    %v405 = vpack.c.b16 %v391, %v390
    %v406 = vpack.c.b16 %v393, %v392
    %v407 = vpack.c.b16 %v395, %v394
    %v408 = vpack.c.b16 %v397, %v396
    %v409 = vpack.c.b16 %v399, %v398
    %v410 = vpack.c.b16 %v401, %v400
    %v411 = vpack.c.b16 %v403, %v402
    %420 = vmatprep.subr.bf16.mxu0 0
    %421 = vmatpush1.bf16.msra.mxu0 %v411
    %422 = vmatprep.subr.bf16.mxu0 0
    %423 = vmatpush1.bf16.msra.mxu0 %v410
    %424 = vmatprep.subr.bf16.mxu0 0
    %425 = vmatpush1.bf16.msra.mxu0 %v409
    %426 = vmatprep.subr.bf16.mxu0 0
    %427 = vmatpush1.bf16.msra.mxu0 %v408
    %428 = vmatprep.subr.bf16.mxu0 0
    %429 = vmatpush1.bf16.msra.mxu0 %v407
    %430 = vmatprep.subr.bf16.mxu0 0
    %431 = vmatpush1.bf16.msra.mxu0 %v406
    %432 = vmatprep.subr.bf16.mxu0 0
    %433 = vmatpush1.bf16.msra.mxu0 %v405
    %434 = vmatprep.subr.bf16.mxu0 0
    %435 = vmatpush1.bf16.msra.mxu0 %v404
    %436 = vmatprep.subr.bf16.mxu0 0
    %437 = vmatpush2.bf16.msra.mxu0 0
    %438 = vmatprep.subr.bf16.mxu0 0
    %439 = vmatpush2.bf16.msra.mxu0 0
    %440 = vmatprep.subr.bf16.mxu0 0
    %441 = vmatpush2.bf16.msra.mxu0 0
    %442 = vmatprep.subr.bf16.mxu0 0
    %443 = vmatpush2.bf16.msra.mxu0 0
    %444 = vmatprep.subr.bf16.mxu0 0
    %445 = vmatpush2.bf16.msra.mxu0 0
    %446 = vmatprep.subr.bf16.mxu0 0
    %447 = vmatpush2.bf16.msra.mxu0 0
    %448 = vmatprep.subr.bf16.mxu0 0
    %449 = vmatpush2.bf16.msra.mxu0 0
    %450 = vmatprep.subr.bf16.mxu0 0
    %451 = vmatpush2.bf16.msra.mxu0 0
    %452 = vmatprep.mubr.bf16.mxu0 0
    %453 = vmatmul.mubr.bf16.gmra.mxu0 %v244
    %v454 = vpop.f32.mrf.mxu0
    %v455 = vadd.f32 %v366, %v454
    %v456 = vpop.f32.mrf.mxu0
    %v457 = vpop.f32.mrf.mxu0
    %v458 = vadd.f32 %v369, %v457
    %v459 = vpop.f32.mrf.mxu0
    %460 = vdwg.mxu0
    %v461 = vld [vmem:[%s6] sm:$0x1]
    %v463 = vlaneseq
    %v464 = vshrl.u32 %v463, 7
    %v465 = vsub.s32 0, %v464
    %v466 = vrot.slane %v461, %v465
    %v468 = vadd.f32 %v455, %v466
    %v469 = vadd.f32 %v458, %v466
    %v470 = vtanh.pop %v468
    %v471 = vtanh.pop %v469
    %v472 = vpack.c.bf16 %v471, %v470
    %v473 = vld [vmem:[#allocation11] sm:$0xf]
    %v474 = vld [vmem:[#allocation11 + $0x4] sm:$0xf]
    %v475 = vld [vmem:[#allocation11 + $0x8] sm:$0xf]
    %v476 = vld [vmem:[#allocation11 + $0xc] sm:$0xf]
    %v477 = vld [vmem:[#allocation11 + $0x10] sm:$0xf]
    %v478 = vld [vmem:[#allocation11 + $0x14] sm:$0xf]
    %v479 = vld [vmem:[#allocation11 + $0x18] sm:$0xf]
    %v480 = vld [vmem:[#allocation11 + $0x1c] sm:$0xf]
    %v481 = vld [vmem:[#allocation11 + $0x20] sm:$0xf]
    %v482 = vld [vmem:[#allocation11 + $0x24] sm:$0xf]
    %v483 = vld [vmem:[#allocation11 + $0x28] sm:$0xf]
    %v484 = vld [vmem:[#allocation11 + $0x2c] sm:$0xf]
    %v485 = vld [vmem:[#allocation11 + $0x30] sm:$0xf]
    %v486 = vld [vmem:[#allocation11 + $0x34] sm:$0xf]
    %v487 = vld [vmem:[#allocation11 + $0x38] sm:$0xf]
    %v488 = vld [vmem:[#allocation11 + $0x3c] sm:$0xf]
    %v489 = vld [vmem:[%s8] sm:$0x1]
    %v491 = vlaneseq
    %v492 = vshrl.u32 %v491, 7
    %v493 = vsub.s32 0, %v492
    %v494 = vrot.slane %v489, %v493
    %v512 = vunpack.c.l.b16 %v473
    %v513 = vunpack.c.l.b16 %v474
    %v514 = vunpack.c.l.b16 %v475
    %v515 = vunpack.c.l.b16 %v476
    %v516 = vunpack.c.l.b16 %v477
    %v517 = vunpack.c.l.b16 %v478
    %v518 = vunpack.c.l.b16 %v479
    %v519 = vunpack.c.l.b16 %v480
    %v520 = vunpack.c.l.b16 %v481
    %v521 = vunpack.c.l.b16 %v482
    %v522 = vunpack.c.l.b16 %v483
    %v523 = vunpack.c.l.b16 %v484
    %v524 = vunpack.c.l.b16 %v485
    %v525 = vunpack.c.l.b16 %v486
    %v526 = vunpack.c.l.b16 %v487
    %v527 = vunpack.c.l.b16 %v488
    %v528 = vpack.c.b16 %v513, %v512
    %v529 = vpack.c.b16 %v515, %v514
    %v530 = vpack.c.b16 %v517, %v516
    %v531 = vpack.c.b16 %v519, %v518
    %v532 = vpack.c.b16 %v521, %v520
    %v533 = vpack.c.b16 %v523, %v522
    %v534 = vpack.c.b16 %v525, %v524
    %v535 = vpack.c.b16 %v527, %v526
    %544 = vmatprep.subr.bf16.mxu0 0
    %545 = vmatpush1.bf16.msra.mxu0 %v535
    %546 = vmatprep.subr.bf16.mxu0 0
    %547 = vmatpush1.bf16.msra.mxu0 %v534
    %548 = vmatprep.subr.bf16.mxu0 0
    %549 = vmatpush1.bf16.msra.mxu0 %v533
    %550 = vmatprep.subr.bf16.mxu0 0
    %551 = vmatpush1.bf16.msra.mxu0 %v532
    %552 = vmatprep.subr.bf16.mxu0 0
    %553 = vmatpush1.bf16.msra.mxu0 %v531
    %554 = vmatprep.subr.bf16.mxu0 0
    %555 = vmatpush1.bf16.msra.mxu0 %v530
    %556 = vmatprep.subr.bf16.mxu0 0
    %557 = vmatpush1.bf16.msra.mxu0 %v529
    %558 = vmatprep.subr.bf16.mxu0 0
    %559 = vmatpush1.bf16.msra.mxu0 %v528
    %560 = vmatprep.subr.bf16.mxu0 0
    %561 = vmatpush2.bf16.msra.mxu0 0
    %562 = vmatprep.subr.bf16.mxu0 0
    %563 = vmatpush2.bf16.msra.mxu0 0
    %564 = vmatprep.subr.bf16.mxu0 0
    %565 = vmatpush2.bf16.msra.mxu0 0
    %566 = vmatprep.subr.bf16.mxu0 0
    %567 = vmatpush2.bf16.msra.mxu0 0
    %568 = vmatprep.subr.bf16.mxu0 0
    %569 = vmatpush2.bf16.msra.mxu0 0
    %570 = vmatprep.subr.bf16.mxu0 0
    %571 = vmatpush2.bf16.msra.mxu0 0
    %572 = vmatprep.subr.bf16.mxu0 0
    %573 = vmatpush2.bf16.msra.mxu0 0
    %574 = vmatprep.subr.bf16.mxu0 0
    %575 = vmatpush2.bf16.msra.mxu0 0
    %576 = vmatprep.mubr.bf16.mxu0 0
    %577 = vmatmul.mubr.bf16.gmra.mxu0 %v472
    %v578 = vpop.f32.mrf.mxu0
    %v579 = vadd.f32 %v494, %v578
    %v580 = vpop.f32.mrf.mxu0
    %v581 = vpop.f32.mrf.mxu0
    %v582 = vadd.f32 %v494, %v581
    %v583 = vpop.f32.mrf.mxu0
    %584 = vdwg.mxu0
    %v585 = vlaneseq
    %v586 = vand.u32 %v585, 127
    %vm587 = vcmp.lt.s32.totalorder %v586, 64
    %v588 = vmax.f32 %v579, -20.0
    %v589 = vmax.f32 %v582, -20.0
    %v590 = vmin.f32 %v588, 2.0
    %v591 = vmin.f32 %v589, 2.0
    %v592 = vsel %vm587, %v579, %v590
    %v593 = vsel %vm587, %v582, %v591
    %594 = vst [vmem:[#allocation16] sm:$0xff] %v592
    %595 = vst [vmem:[#allocation16 + $0x8] sm:$0xff] %v593
    %v597 = vunpack.c.l.b16 %v472
    %v598 = vunpack.c.h.b16 %v472
    %v599 = vpack.c.b16 %v597, %v597
    %v600 = vpack.c.b16 %v598, %v598
    %603 = vst [vmem:[#allocation13] sm:$0xf] %v599
    %604 = vst [vmem:[#allocation13 + $0x4] sm:$0xf] %v600
    %v606 = vunpack.c.l.b16 %v244
    %v607 = vunpack.c.h.b16 %v244
    %v608 = vpack.c.b16 %v606, %v606
    %v609 = vpack.c.b16 %v607, %v607
    %612 = vst [vmem:[#allocation14] sm:$0xf] %v608
    %613 = vst [vmem:[#allocation14 + $0x4] sm:$0xf] %v609
    // Predicated region
    $region62: #{tpu_custom_call.1} parent=1 // pred_check
      _
    $region63: #{tpu_custom_call.1} parent=1 // pred_check_branch
      %615 = sbr.rel (0) target = $region65
    $region64: #{tpu_custom_call.1} parent=1 // pred_region
      %s617 = ssub.s32 128, 128
      %618 = vsyncadd [#allocation4], %s617
      %s619 = sshll.u32 [#allocation13], 4
      %s620 = int_to_ptr.vmem [resolvable:$true] %s619
      %625 = dma.vmem_to_hbm [thread:$0]  %s620, 128, %s9, [#allocation4], 64, 64, 4
    $region65: #{tpu_custom_call.1} parent=1 // pred_fallthru
      _
    // Predicated region
    $region66: #{tpu_custom_call.1} parent=1 // pred_check
      _
    $region67: #{tpu_custom_call.1} parent=1 // pred_check_branch
      %627 = sbr.rel (0) target = $region69
    $region68: #{tpu_custom_call.1} parent=1 // pred_region
      %s629 = ssub.s32 128, 128
      %630 = vsyncadd [#allocation15], %s629
      %s631 = sshll.u32 [#allocation14], 4
      %s632 = int_to_ptr.vmem [resolvable:$true] %s631
      %637 = dma.vmem_to_hbm [thread:$0]  %s632, 128, %s10, [#allocation15], 64, 64, 4
    $region69: #{tpu_custom_call.1} parent=1 // pred_fallthru
      _
    // Predicated region
    $region70: #{tpu_custom_call.1} parent=1 // pred_check
      _
    $region71: #{tpu_custom_call.1} parent=1 // pred_check_branch
      %639 = sbr.rel (0) target = $region73
    $region72: #{tpu_custom_call.1} parent=1 // pred_region
      %s641 = ssub.s32 256, 256
      %642 = vsyncadd [#allocation15], %s641
      %s643 = sshll.u32 [#allocation16], 4
      %s644 = int_to_ptr.vmem [resolvable:$true] %s643
      %649 = dma.vmem_to_hbm [thread:$0]  %s644, 256, %s11, [#allocation15], 128, 128, 8
    $region73: #{tpu_custom_call.1} parent=1 // pred_fallthru
      _
    // Predicated region
    $region74: #{tpu_custom_call.1} parent=1 // pred_check
      _
    $region75: #{tpu_custom_call.1} parent=1 // pred_check_branch
      %651 = sbr.rel (0) target = $region77
    $region76: #{tpu_custom_call.1} parent=1 // pred_region
      %652 = dma.done [#allocation4], 128
    $region77: #{tpu_custom_call.1} parent=1 // pred_fallthru
      _
    // Predicated region
    $region78: #{tpu_custom_call.1} parent=1 // pred_check
      _
    $region79: #{tpu_custom_call.1} parent=1 // pred_check_branch
      %654 = sbr.rel (0) target = $region81
    $region80: #{tpu_custom_call.1} parent=1 // pred_region
      %655 = dma.done [#allocation15], 128
    $region81: #{tpu_custom_call.1} parent=1 // pred_fallthru
      _
    // Predicated region
    $region82: #{tpu_custom_call.1} parent=1 // pred_check
      _
    $region83: #{tpu_custom_call.1} parent=1 // pred_check_branch
      %657 = sbr.rel (0) target = $region85
    $region84: #{tpu_custom_call.1} parent=1 // pred_region
      %658 = dma.done [#allocation15], 256
    $region85: #{tpu_custom_call.1} parent=1 // pred_fallthru
      _
    %659 = vsyncpa [#allocation3], 1
    %660 = vsyncpa [#allocation6], 1
    %661 = vsyncpa [#allocation9], 1
    %662 = vsyncpa [#allocation12], 1
    %663 = vsyncpa [#allocation4], 1
    %664 = vsyncpa [#allocation15], 1

</llo_original>
